<compile_context>
chip_gen: v6e
topology: v6e:2x2x1
jax: 0.10.0
libtpu: 0.0.40
codegen_flags: <defaults>
</compile_context>

<pallas_src>
import jax
import jax.numpy as jnp
from jax.experimental import pallas as pl
from jax.experimental.pallas import tpu as pltpu


def _round_up(x: int, m: int) -> int:
    return ((x + m - 1) // m) * m


def _pooler_kernel(h_ref, w_ref, b_ref, o_ref):
    # h_ref: (bt, 2*H)      -- tokens 0 and 1 flattened into the lane dim
    # w_ref: (H, H_out)     -- pre-transposed, pre-scaled by 0.5, VMEM-resident
    # b_ref: (1, H_out)
    # o_ref: (bt, H_out)
    h = w_ref.shape[0]
    # Token sum in the native dtype; the 1/2 of the mean is folded into w_ref.
    s = h_ref[:, :h] + h_ref[:, h:2 * h]
    # MXU-native contraction (K on last dim of lhs / first dim of rhs), f32 acc.
    y = jnp.dot(s, w_ref[...], preferred_element_type=jnp.float32)
    y = y + b_ref[...].astype(jnp.float32)
    o_ref[...] = jnp.tanh(y).astype(o_ref.dtype)


def bert_synergy_pooler(hidden_states, weight, bias, *, b_tile=512):
    """hidden_states: (B, S, H_in); weight: (H_out, H_in) PyTorch layout; bias: (H_out,)."""
    B, S, H = hidden_states.shape
    H_out, H_in = weight.shape
    assert S >= 2 and H_in == H and bias.shape == (H_out,)

    if (2 * H) % 128 == 0:
        # Metadata-only reshape; the BlockSpec below reads just the first 2*H
        # lanes of each (S*H)-wide row, i.e. tokens 0 and 1 — one HBM pass.
        x = hidden_states.reshape(B, S * H)
    else:
        # Lane-unaligned H: fall back to one explicit slice so the block's
        # last dim equals the full array dim (layout constraint).
        x = hidden_states[:, :2, :].reshape(B, 2 * H)

    # One-time wrapper prep: fold the token-mean 1/2 into the weight (exact,
    # power of two) and pre-transpose to (H_in, H_out) so Mosaic never has to
    # relayout/transpose the weight tile inside the grid loop.
    w_t = (weight * 0.5).T                      # (H_in, H_out)
    b2d = bias.reshape(1, H_out)

    if B <= 8:
        bt = B                                  # single full-batch tile
    else:
        # Multiple of 8 (sublane), capped by the VMEM budget (b_tile), and
        # small enough that the parallel batch grid has >= 2 steps (v7x).
        bt = min(max(8, (b_tile // 8) * 8), _round_up(pl.cdiv(B, 2), 8))
    grid = (pl.cdiv(B, bt),)                    # ragged tail handled by Pallas

    return pl.pallas_call(
        _pooler_kernel,
        out_shape=jax.ShapeDtypeStruct((B, H_out), hidden_states.dtype),
        grid=grid,
        in_specs=[
            # Activations: batch-tiled, pipelined; only columns [0, 2H) read.
            pl.BlockSpec((bt, 2 * H), lambda i: (i, 0)),
            # Weight & bias: constant block index -> stay resident in VMEM.
            pl.BlockSpec((H_in, H_out), lambda i: (0, 0)),
            pl.BlockSpec((1, H_out), lambda i: (0, 0)),
        ],
        out_specs=pl.BlockSpec((bt, H_out), lambda i: (i, 0)),
        compiler_params=pltpu.CompilerParams(
            dimension_semantics=("parallel",)),
    )(x, w_t, b2d)


def _reference(hidden_states, weight, bias):
    first = jnp.mean(hidden_states[:, :2], axis=1)
    return jnp.tanh(first @ weight.T + bias)


def _run_case(key, B, S, H, dtype=jnp.float32):
    k_h, k_w, k_b = jax.random.split(key, 3)
    hs = jax.random.normal(k_h, (B, S, H), dtype=dtype)
    w = jax.random.normal(k_w, (H, H), dtype=dtype) * 0.02
    b = jax.random.normal(k_b, (H,), dtype=dtype) * 0.02
    out = jax.block_until_ready(bert_synergy_pooler(hs, w, b))
    ref = _reference(hs, w, b)
    assert out.shape == (B, H), f"bad shape for B={B},S={S},H={H}"
    assert jnp.allclose(out, ref, atol=1e-4, rtol=1e-4), \
        f"mismatch vs reference for B={B},S={S},H={H}"


if __name__ == "__main__":
    root = jax.random.PRNGKey(0)
    k0, k1, k2 = jax.random.split(root, 3)

    # Primary small case: 128-lane aligned path, single batch tile.
    _run_case(k0, B=2, S=8, H=128)
    # Multi-step parallel grid + ragged batch tail (20 rows, 16-row tiles).
    _run_case(k1, B=20, S=8, H=128)
    # Lane-unaligned hidden size -> wrapper fallback slice path.
    _run_case(k2, B=5, S=8, H=32)

    print("KERNEL_OK")
</pallas_src>

<mosaic_0001>
module attributes {stable_mosaic.version = 11 : i64} {
  func.func @_pooler_kernel(%arg0: i32, %arg1: memref<2x256xf32, #tpu.memory_space<vmem>>, %arg2: memref<128x128xf32, #tpu.memory_space<vmem>>, %arg3: memref<1x128xf32, #tpu.memory_space<vmem>>, %arg4: memref<2x128xf32, #tpu.memory_space<vmem>>) attributes {dimension_semantics = [#tpu.dimension_semantics<parallel>], iteration_bounds = array<i64: 1>, scalar_prefetch = 0 : i64, scratch_operands = 0 : i64, tpu.core_type = #tpu.core_type<tc>, window_params = [{transform_indices = @transform_0, window_bounds = array<i64: 2, 256>}, {pipeline_mode = #tpu.pipeline_mode<synchronous>, transform_indices = @transform_1, window_bounds = array<i64: 128, 128>}, {pipeline_mode = #tpu.pipeline_mode<synchronous>, transform_indices = @transform_2, window_bounds = array<i64: 1, 128>}, {transform_indices = @transform_3, window_bounds = array<i64: 2, 128>}]} {
    %c0 = arith.constant 0 : index
    %c0_0 = arith.constant 0 : index
    %0 = vector.load %arg1[%c0, %c0_0] : memref<2x256xf32, #tpu.memory_space<vmem>>, vector<2x128xf32>
    %c0_1 = arith.constant 0 : index
    %c128 = arith.constant 128 : index
    %1 = vector.load %arg1[%c0_1, %c128] : memref<2x256xf32, #tpu.memory_space<vmem>>, vector<2x128xf32>
    %2 = arith.addf %0, %1 : vector<2x128xf32>
    %c0_2 = arith.constant 0 : index
    %c0_3 = arith.constant 0 : index
    %3 = vector.load %arg2[%c0_2, %c0_3] : memref<128x128xf32, #tpu.memory_space<vmem>>, vector<128x128xf32>
    %cst = arith.constant dense<0.000000e+00> : vector<2x128xf32>
    %4 = tpu.matmul %2, %3, %cst {dimension_numbers = #tpu.dot_dimension_numbers<[1], [0], [0], [1], [0, 0, 1, 1], [], []>} : vector<2x128xf32>, vector<128x128xf32>, vector<2x128xf32> -> vector<2x128xf32>
    %c0_4 = arith.constant 0 : index
    %c0_5 = arith.constant 0 : index
    %5 = vector.load %arg3[%c0_4, %c0_5] : memref<1x128xf32, #tpu.memory_space<vmem>>, vector<1x128xf32>
    %6 = vector.broadcast %5 : vector<1x128xf32> to vector<2x128xf32>
    %7 = arith.addf %4, %6 : vector<2x128xf32>
    %8 = math.tanh %7 : vector<2x128xf32>
    %c0_6 = arith.constant 0 : index
    %c0_7 = arith.constant 0 : index
    %9 = vector.load %arg4[%c0_6, %c0_7] : memref<2x128xf32, #tpu.memory_space<vmem>>, vector<2x128xf32>
    tpu.vector_store %arg4[%c0_6, %c0_7], %8 {strides = array<i32>} : memref<2x128xf32, #tpu.memory_space<vmem>>, vector<2x128xf32>,
    return
  }
  func.func @transform_0(%arg0: i32) -> (i32, i32) {
    %c0_i32 = arith.constant 0 : i32
    %c0_i32_0 = arith.constant 0 : i32
    return %arg0, %c0_i32 : i32, i32
  }
  func.func @transform_1(%arg0: i32) -> (i32, i32) {
    %c0_i32 = arith.constant 0 : i32
    %c0_i32_0 = arith.constant 0 : i32
    %c0_i32_1 = arith.constant 0 : i32
    return %c0_i32, %c0_i32_0 : i32, i32
  }
  func.func @transform_2(%arg0: i32) -> (i32, i32) {
    %c0_i32 = arith.constant 0 : i32
    %c0_i32_0 = arith.constant 0 : i32
    %c0_i32_1 = arith.constant 0 : i32
    return %c0_i32, %c0_i32_0 : i32, i32
  }
  func.func @transform_3(%arg0: i32) -> (i32, i32) {
    %c0_i32 = arith.constant 0 : i32
    %c0_i32_0 = arith.constant 0 : i32
    return %arg0, %c0_i32 : i32, i32
  }
}

</mosaic_0001>

<llo_original>
// kernel: tpu_custom_call.1
$region0: #{tpu_custom_call.1}
  #allocation0 [shape = 'u32[]', space=smem, size = 0x4, offset = 0x4, fixed_abs, tag = 'smem constant byte address 0x4 - core index']
  #allocation1 [shape = 'u32[144,128]{1,0:T(1,128)}', space=vmem, size = 0x12000, scoped, tag = 'internal scratch']
  %s0 = inlined_call_operand.hbm [shape: f32[2,1024], index: 0, kind: input, shape index: {}]
  %s1 = inlined_call_operand.hbm [shape: f32[128,128], index: 1, kind: input, shape index: {}]
  %s2 = inlined_call_operand.vmem [shape: f32[1,128], index: 2, kind: input, shape index: {}]
  %s3 = inlined_call_operand.hbm [shape: f32[2,128], index: 3, kind: output, shape index: {}]
  %s4 = sld [smem:[#allocation0]]
  $region30: #{tpu_custom_call.1} parent=0
    _
  %s6 = ssub.s32 1, %s4
  %s7 = scalar_select 0, %s6, %s4
  $region1: #{tpu_custom_call.1} parent=0
    #allocation2 [shape = 'u8[2048]{0}', space=vmem, size = 0x800, scoped, tag = 'input window, operand 0, single buffered']
    #allocation3 [shape = 's32[1]{0}', space=sflag, size = 0x4, scoped, tag = 'scoped memory for tpu_custom_call.1']
    #allocation4 [shape = 's32[1]{0}', space=sflag, size = 0x4, scoped, tag = 'scoped memory for tpu_custom_call.1']
    #allocation5 [shape = 'u8[65536]{0}', space=vmem, size = 0x10000, scoped, tag = 'input window, operand 1, single buffered']
    #allocation6 [shape = 's32[1]{0}', space=sflag, size = 0x4, scoped, tag = 'scoped memory for tpu_custom_call.1']
    #allocation7 [shape = 'u8[1024]{0}', space=vmem, size = 0x400, scoped, tag = 'output window, operand 0, single buffered']
    %8 = vsyncpa [#allocation3], 0
    %9 = vsyncpa [#allocation6], 0
    %10 = vsyncpa [#allocation4], 0
    // Predicated region
    $region2: #{tpu_custom_call.1} parent=1 // pred_check
      _
    $region3: #{tpu_custom_call.1} parent=1 // pred_check_branch
      %12 = sbr.rel (0) target = $region5
    $region4: #{tpu_custom_call.1} parent=1 // pred_region
      %s14 = ssub.s32 64, 64
      %15 = vsyncadd [#allocation3], %s14
      %s17 = sshll.u32 [#allocation2], 4
      %s18 = int_to_ptr.vmem [resolvable:$true] %s17
      %20 = dma.hbm_to_vmem [thread:$0]  %s0, 64, %s18, [#allocation3]
    $region5: #{tpu_custom_call.1} parent=1 // pred_fallthru
      _
    // Predicated region
    $region6: #{tpu_custom_call.1} parent=1 // pred_check
      _
    $region7: #{tpu_custom_call.1} parent=1 // pred_check_branch
      %22 = sbr.rel (0) target = $region9
    $region8: #{tpu_custom_call.1} parent=1 // pred_region
      %s24 = ssub.s32 2048, 2048
      %25 = vsyncadd [#allocation6], %s24
      %s26 = sshll.u32 [#allocation5], 4
      %s27 = int_to_ptr.vmem [resolvable:$true] %s26
      %32 = dma.hbm_to_vmem [thread:$0]  %s1, 2048, %s27, [#allocation6], 128, 128, 8
    $region9: #{tpu_custom_call.1} parent=1 // pred_fallthru
      _
    // Predicated region
    $region10: #{tpu_custom_call.1} parent=1 // pred_check
      _
    $region11: #{tpu_custom_call.1} parent=1 // pred_check_branch
      %34 = sbr.rel (0) target = $region13
    $region12: #{tpu_custom_call.1} parent=1 // pred_region
      _
    $region13: #{tpu_custom_call.1} parent=1 // pred_fallthru
      _
    // Predicated region
    $region14: #{tpu_custom_call.1} parent=1 // pred_check
      _
    $region15: #{tpu_custom_call.1} parent=1 // pred_check_branch
      %36 = sbr.rel (0) target = $region17
    $region16: #{tpu_custom_call.1} parent=1 // pred_region
      %37 = dma.done [#allocation3], 64
    $region17: #{tpu_custom_call.1} parent=1 // pred_fallthru
      _
    // Predicated region
    $region18: #{tpu_custom_call.1} parent=1 // pred_check
      _
    $region19: #{tpu_custom_call.1} parent=1 // pred_check_branch
      %39 = sbr.rel (0) target = $region21
    $region20: #{tpu_custom_call.1} parent=1 // pred_region
      %40 = dma.done [#allocation6], 2048
    $region21: #{tpu_custom_call.1} parent=1 // pred_fallthru
      _
    %v41 = vld [vmem:[#allocation2] sm:$0x3]
    %v42 = vld [vmem:[#allocation2 + $0x2] sm:$0x3]
    %v43 = vadd.f32 %v41, %v42
    %v44 = vld [vmem:[#allocation5] sm:$0xff]
    %v45 = vld [vmem:[#allocation5 + $0x8] sm:$0xff]
    %v46 = vld [vmem:[#allocation5 + $0x10] sm:$0xff]
    %v47 = vld [vmem:[#allocation5 + $0x18] sm:$0xff]
    %v48 = vld [vmem:[#allocation5 + $0x20] sm:$0xff]
    %v49 = vld [vmem:[#allocation5 + $0x28] sm:$0xff]
    %v50 = vld [vmem:[#allocation5 + $0x30] sm:$0xff]
    %v51 = vld [vmem:[#allocation5 + $0x38] sm:$0xff]
    %v52 = vld [vmem:[#allocation5 + $0x40] sm:$0xff]
    %v53 = vld [vmem:[#allocation5 + $0x48] sm:$0xff]
    %v54 = vld [vmem:[#allocation5 + $0x50] sm:$0xff]
    %v55 = vld [vmem:[#allocation5 + $0x58] sm:$0xff]
    %v56 = vld [vmem:[#allocation5 + $0x60] sm:$0xff]
    %v57 = vld [vmem:[#allocation5 + $0x68] sm:$0xff]
    %v58 = vld [vmem:[#allocation5 + $0x70] sm:$0xff]
    %v59 = vld [vmem:[#allocation5 + $0x78] sm:$0xff]
    %v60 = vld [vmem:[%s2] sm:$0x1]
    %v62 = vlaneseq
    %v63 = vshrl.u32 %v62, 7
    %v64 = vsub.s32 0, %v63
    %v65 = vrot.slane %v60, %v64
    %67 = vmatprep.subr.mxu0 0.0
    %68 = vmatpush1.msra.mxu0 %v59
    %69 = vmatprep.subr.mxu0 0.0
    %70 = vmatpush1.msra.mxu0 %v58
    %71 = vmatprep.subr.mxu0 0.0
    %72 = vmatpush1.msra.mxu0 %v57
    %73 = vmatprep.subr.mxu0 0.0
    %74 = vmatpush1.msra.mxu0 %v56
    %75 = vmatprep.subr.mxu0 0.0
    %76 = vmatpush1.msra.mxu0 %v55
    %77 = vmatprep.subr.mxu0 0.0
    %78 = vmatpush1.msra.mxu0 %v54
    %79 = vmatprep.subr.mxu0 0.0
    %80 = vmatpush1.msra.mxu0 %v53
    %81 = vmatprep.subr.mxu0 0.0
    %82 = vmatpush1.msra.mxu0 %v52
    %83 = vmatprep.subr.mxu0 0.0
    %84 = vmatpush1.msra.mxu0 %v51
    %85 = vmatprep.subr.mxu0 0.0
    %86 = vmatpush1.msra.mxu0 %v50
    %87 = vmatprep.subr.mxu0 0.0
    %88 = vmatpush1.msra.mxu0 %v49
    %89 = vmatprep.subr.mxu0 0.0
    %90 = vmatpush1.msra.mxu0 %v48
    %91 = vmatprep.subr.mxu0 0.0
    %92 = vmatpush1.msra.mxu0 %v47
    %93 = vmatprep.subr.mxu0 0.0
    %94 = vmatpush1.msra.mxu0 %v46
    %95 = vmatprep.subr.mxu0 0.0
    %96 = vmatpush1.msra.mxu0 %v45
    %97 = vmatprep.subr.mxu0 0.0
    %98 = vmatpush1.msra.mxu0 %v44
    %99 = vmatprep.subr.mxu0 0.0
    %100 = vmatpush2.msra.mxu0 0.0
    %101 = vmatprep.subr.mxu0 0.0
    %102 = vmatpush2.msra.mxu0 0.0
    %103 = vmatprep.subr.mxu0 0.0
    %104 = vmatpush2.msra.mxu0 0.0
    %105 = vmatprep.subr.mxu0 0.0
    %106 = vmatpush2.msra.mxu0 0.0
    %107 = vmatprep.subr.mxu0 0.0
    %108 = vmatpush2.msra.mxu0 0.0
    %109 = vmatprep.subr.mxu0 0.0
    %110 = vmatpush2.msra.mxu0 0.0
    %111 = vmatprep.subr.mxu0 0.0
    %112 = vmatpush2.msra.mxu0 0.0
    %113 = vmatprep.subr.mxu0 0.0
    %114 = vmatpush2.msra.mxu0 0.0
    %115 = vmatprep.subr.mxu0 0.0
    %116 = vmatpush2.msra.mxu0 0.0
    %117 = vmatprep.subr.mxu0 0.0
    %118 = vmatpush2.msra.mxu0 0.0
    %119 = vmatprep.subr.mxu0 0.0
    %120 = vmatpush2.msra.mxu0 0.0
    %121 = vmatprep.subr.mxu0 0.0
    %122 = vmatpush2.msra.mxu0 0.0
    %123 = vmatprep.subr.mxu0 0.0
    %124 = vmatpush2.msra.mxu0 0.0
    %125 = vmatprep.subr.mxu0 0.0
    %126 = vmatpush2.msra.mxu0 0.0
    %127 = vmatprep.subr.mxu0 0.0
    %128 = vmatpush2.msra.mxu0 0.0
    %129 = vmatprep.subr.mxu0 0.0
    %130 = vmatpush2.msra.mxu0 0.0
    %131 = vmatprep.mubr.f32.mxu0 0.0
    %132 = vmatmul.mubr.f32.gmra.mxu0 %v43
    %v133 = vpop.f32.mrf.mxu0
    %v134 = vadd.f32 %v65, %v133
    %v135 = vpop.f32.mrf.mxu0
    %136 = vdwg.mxu0
    %v137 = vtanh.pop %v134
    %138 = vst [vmem:[#allocation7] sm:$0x3] %v137
    // Predicated region
    $region22: #{tpu_custom_call.1} parent=1 // pred_check
      _
    $region23: #{tpu_custom_call.1} parent=1 // pred_check_branch
      %140 = sbr.rel (0) target = $region25
    $region24: #{tpu_custom_call.1} parent=1 // pred_region
      %s142 = ssub.s32 32, 32
      %143 = vsyncadd [#allocation4], %s142
      %s145 = sshll.u32 [#allocation7], 4
      %s146 = int_to_ptr.vmem [resolvable:$true] %s145
      %148 = dma.vmem_to_hbm [thread:$0]  %s146, 32, %s3, [#allocation4]
    $region25: #{tpu_custom_call.1} parent=1 // pred_fallthru
      _
    // Predicated region
    $region26: #{tpu_custom_call.1} parent=1 // pred_check
      _
    $region27: #{tpu_custom_call.1} parent=1 // pred_check_branch
      %150 = sbr.rel (0) target = $region29
    $region28: #{tpu_custom_call.1} parent=1 // pred_region
      %151 = dma.done [#allocation4], 32
    $region29: #{tpu_custom_call.1} parent=1 // pred_fallthru
      _
    %152 = vsyncpa [#allocation3], 1
    %153 = vsyncpa [#allocation6], 1
    %154 = vsyncpa [#allocation4], 1

</llo_original>
